<compile_context>
chip_gen: v7x
topology: tpu7x:2x2x1
jax: 0.10.0
libtpu: 0.0.40
codegen_flags: <defaults>
</compile_context>

<pallas_src>
import functools

import jax
import jax.numpy as jnp
from jax import lax
from jax.experimental import pallas as pl
from jax.experimental.pallas import tpu as pltpu

_LANE = 128
_BLOCK_ROWS = 2048          # (2048, 128) f32 = 1 MiB per pipeline buffer


def _planar_flow_kernel(scalars_ref, z_ref, wpat_ref, upat_ref,
                        zout_ref, logdet_ref, *, d):
    b = scalars_ref[0]            # scalar bias            (SMEM)
    uhw = scalars_ref[1]          # sum(u_hat * w)         (SMEM)

    z = z_ref[...]                # (TS, 128) flat row-major view, D lanes/sample
    w_pat = wpat_ref[...]         # (1, 128) f32: w tiled across lanes (period d)
    u_pat = upat_ref[...]         # (1, 128) f32: u_hat tiled across lanes

    s = z * w_pat                 # promoted to f32; per-element w_d * z[i, d]

    # Segment sum over each aligned group of d lanes (= one sample), duplicated
    # to every lane of the group: hypercube butterfly of lane rotations (XLU).
    # The rolled lane-iota row tells us which rotation actually delivered the
    # partner lane, so the select is correct for either rotate convention.
    lane_row = lax.broadcasted_iota(jnp.int32, (1, _LANE), 1)
    shift = 1
    while shift < d:              # unrolled at trace time (1 step for D=2)
        fwd = pltpu.roll(s, _LANE - shift, axis=1)
        bwd = pltpu.roll(s, shift, axis=1)
        src_row = pltpu.roll(lane_row, _LANE - shift, axis=1)
        # f32 0/1 blend mask (row-shaped; broadcast over sublanes is cheap and
        # avoids relying on boolean-mask broadcasting support).
        take_fwd = (src_row == (lane_row ^ shift)).astype(jnp.float32)
        s = s + (take_fwd * fwd + (1.0 - take_fwd) * bwd)
        shift *= 2
    # s now holds wTz for the sample owning each lane (duplicated per group).

    t = jnp.tanh(s + b)                                   # dense (TS, 128) EUP work
    sech2 = (1.0 - t) * (1.0 + t)                         # sech^2 = 1 - tanh^2
    logdet_ref[...] = jnp.log(jnp.abs(1.0 + uhw * sech2)).astype(logdet_ref.dtype)
    zout_ref[...] = (z + u_pat * t).astype(zout_ref.dtype)


def planar_flow(z, w, u, b):
    """z: (N, D); w, u: (1, D); b: (1,). Returns (z_out (N, D), log_det (N,))."""
    N, D = z.shape
    dtype = z.dtype
    if (D & (D - 1)) or D > _LANE:
        # TODO(synk): general-D path (sublane-reduction layout) for feature dims
        # that are not a power of two <= 128; the module's default is D == 2.
        raise NotImplementedError("planar_flow kernel expects power-of-two D <= 128")

    # ---- z-independent parameter math, hoisted out of the kernel ----
    w32 = w.reshape(-1).astype(jnp.float32)
    u32 = u.reshape(-1).astype(jnp.float32)
    uTw = jnp.sum(w32 * u32)
    softplus = jnp.logaddexp(0.0, uTw)                    # stable log(1 + exp(uTw))
    u_hat = u32 + (softplus - 1.0 - uTw) * w32 / jnp.sum(w32 * w32)
    uhw = jnp.sum(u_hat * w32)
    scalars = jnp.stack([b.reshape(()).astype(jnp.float32), uhw])   # (2,) -> SMEM

    reps = _LANE // D
    w_pat = jnp.tile(w32, reps).reshape(1, _LANE)
    uh_pat = jnp.tile(u_hat, reps).reshape(1, _LANE)

    # ---- flat lane-dense layout: (N, D) -> (M, 128), no transpose, tiny pad ----
    spr = _LANE // D                          # samples per 128-lane row
    n_pad = pl.cdiv(N, spr) * spr             # pad by < spr samples only
    zp = z if n_pad == N else jnp.pad(z, ((0, n_pad - N), (0, 0)))
    M = (n_pad * D) // _LANE
    zf = zp.reshape(M, _LANE)                 # contiguous reshape: no data movement

    # Row tiling: blocks <= 1 MiB, rows a multiple of 8 sublanes (or the whole
    # array), and >= 2 grid steps when possible so v7x can use both TensorCores.
    if M <= 8:
        ts = M
    else:
        ts = min(_BLOCK_ROWS, ((M + 1) // 2 + 7) // 8 * 8)
    grid = (pl.cdiv(M, ts),)

    # Alias z into z_out only when zf is a fresh padded intermediate; aliasing a
    # non-donated entry parameter would make XLA insert a defensive full copy.
    io_aliases = {1: 0} if n_pad != N else {}

    z_out_flat, logdet_flat = pl.pallas_call(
        functools.partial(_planar_flow_kernel, d=D),
        out_shape=(
            jax.ShapeDtypeStruct((M, _LANE), dtype),      # z_out, same flat layout
            jax.ShapeDtypeStruct((M, _LANE), dtype),      # log_det, dup per sample
        ),
        grid=grid,
        in_specs=[
            pl.BlockSpec(memory_space=pltpu.MemorySpace.SMEM),   # (b, uhw) scalars
            pl.BlockSpec((ts, _LANE), lambda i: (i, 0)),         # z tile
            pl.BlockSpec((1, _LANE), lambda i: (0, 0)),          # w lane pattern
            pl.BlockSpec((1, _LANE), lambda i: (0, 0)),          # u_hat lane pattern
        ],
        out_specs=(
            pl.BlockSpec((ts, _LANE), lambda i: (i, 0)),         # z_out tile
            pl.BlockSpec((ts, _LANE), lambda i: (i, 0)),         # log_det tile
        ),
        input_output_aliases=io_aliases,
        compiler_params=pltpu.CompilerParams(
            dimension_semantics=("parallel",),
            vmem_limit_bytes=32 * 1024 * 1024,
        ),
    )(scalars, zf, w_pat, uh_pat)

    z_out = z_out_flat.reshape(n_pad, D)                  # free reshape back
    log_det = logdet_flat.reshape(n_pad, D)[:, 0]         # one value per sample
    if n_pad != N:
        z_out = z_out[:N]
        log_det = log_det[:N]
    return z_out, log_det


def planar_flow_ref(z, w, u, b):
    """Pure-JAX reference mirroring the PyTorch forward."""
    uTw = jnp.sum(w * u)
    u_hat = u + (jnp.log(1.0 + jnp.exp(uTw)) - 1.0 - uTw) * w / jnp.sum(w * w)
    wTz = jnp.sum(w * z, axis=1, keepdims=True)
    log_det = jnp.log(
        jnp.abs(1.0 + jnp.sum(u_hat * w) / jnp.cosh(wTz + b).reshape(-1) ** 2)
    )
    z_out = z + u_hat * jnp.tanh(wTz + b)
    return z_out, log_det


if __name__ == "__main__":
    key = jax.random.PRNGKey(0)
    k_w, k_u, k_b, k_z = jax.random.split(key, 4)

    D = 2     # module default: shape=2
    N = 8     # small batch

    w = jax.random.normal(k_w, (1, D), dtype=jnp.float32)
    u = jax.random.normal(k_u, (1, D), dtype=jnp.float32)
    b = jax.random.normal(k_b, (1,), dtype=jnp.float32)
    z = jax.random.normal(k_z, (N, D), dtype=jnp.float32)

    planar_flow_jit = jax.jit(planar_flow)
    z_out, log_det = planar_flow_jit(z, w, u, b)
    jax.block_until_ready((z_out, log_det))

    # Correctness check against the pure-JAX reference.
    z_ref, ld_ref = planar_flow_ref(z, w, u, b)
    assert z_out.shape == (N, D) and log_det.shape == (N,)
    assert jnp.allclose(z_out, z_ref, atol=1e-5, rtol=1e-5)
    assert jnp.allclose(log_det, ld_ref, atol=1e-5, rtol=1e-5)

    print("KERNEL_OK")
</pallas_src>

<mosaic_0001>
module attributes {stable_mosaic.version = 11 : i64} {
  func.func @_planar_flow_kernel(%arg0: i32, %arg1: memref<2xf32, #tpu.memory_space<smem>>, %arg2: memref<1x128xf32, #tpu.memory_space<vmem>>, %arg3: memref<1x128xf32, #tpu.memory_space<vmem>>, %arg4: memref<1x128xf32, #tpu.memory_space<vmem>>, %arg5: memref<1x128xf32, #tpu.memory_space<vmem>>, %arg6: memref<1x128xf32, #tpu.memory_space<vmem>>) attributes {dimension_semantics = [#tpu.dimension_semantics<parallel>], iteration_bounds = array<i64: 1>, scalar_prefetch = 0 : i64, scratch_operands = 0 : i64, tpu.core_type = #tpu.core_type<tc>, window_params = [{transform_indices = @transform_0, window_bounds = array<i64: 2>}, {transform_indices = @transform_1, window_bounds = array<i64: 1, 128>}, {pipeline_mode = #tpu.pipeline_mode<synchronous>, transform_indices = @transform_2, window_bounds = array<i64: 1, 128>}, {pipeline_mode = #tpu.pipeline_mode<synchronous>, transform_indices = @transform_3, window_bounds = array<i64: 1, 128>}, {transform_indices = @transform_4, window_bounds = array<i64: 1, 128>}, {transform_indices = @transform_5, window_bounds = array<i64: 1, 128>}]} {
    %c0 = arith.constant 0 : index
    %0 = memref.load %arg1[%c0] : memref<2xf32, #tpu.memory_space<smem>>
    %c1 = arith.constant 1 : index
    %1 = memref.load %arg1[%c1] : memref<2xf32, #tpu.memory_space<smem>>
    %c0_0 = arith.constant 0 : index
    %c0_1 = arith.constant 0 : index
    %2 = vector.load %arg2[%c0_0, %c0_1] : memref<1x128xf32, #tpu.memory_space<vmem>>, vector<1x128xf32>
    %c0_2 = arith.constant 0 : index
    %c0_3 = arith.constant 0 : index
    %3 = vector.load %arg3[%c0_2, %c0_3] : memref<1x128xf32, #tpu.memory_space<vmem>>, vector<1x128xf32>
    %c0_4 = arith.constant 0 : index
    %c0_5 = arith.constant 0 : index
    %4 = vector.load %arg4[%c0_4, %c0_5] : memref<1x128xf32, #tpu.memory_space<vmem>>, vector<1x128xf32>
    %5 = arith.mulf %2, %3 : vector<1x128xf32>
    %6 = tpu.iota {dimensions = array<i32: 1>} : vector<1x128xi32>
    %c127_i32 = arith.constant 127 : i32
    %7 = tpu.dynamic_rotate %5 by %c127_i32 dim 1 : vector<1x128xf32>, i32 -> vector<1x128xf32>
    %c1_i32 = arith.constant 1 : i32
    %8 = tpu.dynamic_rotate %5 by %c1_i32 dim 1 : vector<1x128xf32>, i32 -> vector<1x128xf32>
    %c127_i32_6 = arith.constant 127 : i32
    %9 = tpu.dynamic_rotate %6 by %c127_i32_6 dim 1 : vector<1x128xi32>, i32 -> vector<1x128xi32>
    %c1_i32_7 = arith.constant 1 : i32
    %10 = vector.broadcast %c1_i32_7 : i32 to vector<1x128xi32>
    %11 = arith.xori %6, %10 : vector<1x128xi32>
    %12 = arith.cmpi eq, %9, %11 : vector<1x128xi32>
    %13 = arith.extui %12 : vector<1x128xi1> to vector<1x128xi32>
    %14 = arith.sitofp %13 : vector<1x128xi32> to vector<1x128xf32>
    %15 = arith.mulf %14, %7 : vector<1x128xf32>
    %cst = arith.constant 1.000000e+00 : f32
    %16 = vector.broadcast %cst : f32 to vector<1x128xf32>
    %17 = arith.subf %16, %14 : vector<1x128xf32>
    %18 = arith.mulf %17, %8 : vector<1x128xf32>
    %19 = arith.addf %15, %18 : vector<1x128xf32>
    %20 = arith.addf %5, %19 : vector<1x128xf32>
    %21 = vector.broadcast %0 : f32 to vector<1x128xf32>
    %22 = arith.addf %20, %21 : vector<1x128xf32>
    %23 = math.tanh %22 : vector<1x128xf32>
    %cst_8 = arith.constant 1.000000e+00 : f32
    %24 = vector.broadcast %cst_8 : f32 to vector<1x128xf32>
    %25 = arith.subf %24, %23 : vector<1x128xf32>
    %cst_9 = arith.constant 1.000000e+00 : f32
    %26 = vector.broadcast %cst_9 : f32 to vector<1x128xf32>
    %27 = arith.addf %26, %23 : vector<1x128xf32>
    %28 = arith.mulf %25, %27 : vector<1x128xf32>
    %29 = vector.broadcast %1 : f32 to vector<1x128xf32>
    %30 = arith.mulf %29, %28 : vector<1x128xf32>
    %cst_10 = arith.constant 1.000000e+00 : f32
    %31 = vector.broadcast %cst_10 : f32 to vector<1x128xf32>
    %32 = arith.addf %31, %30 : vector<1x128xf32>
    %33 = math.absf %32 : vector<1x128xf32>
    %34 = math.log %33 : vector<1x128xf32>
    %c0_11 = arith.constant 0 : index
    %c0_12 = arith.constant 0 : index
    %35 = vector.load %arg6[%c0_11, %c0_12] : memref<1x128xf32, #tpu.memory_space<vmem>>, vector<1x128xf32>
    tpu.vector_store %arg6[%c0_11, %c0_12], %34 {strides = array<i32>} : memref<1x128xf32, #tpu.memory_space<vmem>>, vector<1x128xf32>,
    %36 = arith.mulf %4, %23 : vector<1x128xf32>
    %37 = arith.addf %2, %36 : vector<1x128xf32>
    %c0_13 = arith.constant 0 : index
    %c0_14 = arith.constant 0 : index
    %38 = vector.load %arg5[%c0_13, %c0_14] : memref<1x128xf32, #tpu.memory_space<vmem>>, vector<1x128xf32>
    tpu.vector_store %arg5[%c0_13, %c0_14], %37 {strides = array<i32>} : memref<1x128xf32, #tpu.memory_space<vmem>>, vector<1x128xf32>,
    return
  }
  func.func @transform_0(%arg0: i32) -> i32 {
    %c0_i32 = arith.constant 0 : i32
    %c0_i32_0 = arith.constant 0 : i32
    return %c0_i32 : i32
  }
  func.func @transform_1(%arg0: i32) -> (i32, i32) {
    %c0_i32 = arith.constant 0 : i32
    %c0_i32_0 = arith.constant 0 : i32
    return %arg0, %c0_i32 : i32, i32
  }
  func.func @transform_2(%arg0: i32) -> (i32, i32) {
    %c0_i32 = arith.constant 0 : i32
    %c0_i32_0 = arith.constant 0 : i32
    %c0_i32_1 = arith.constant 0 : i32
    return %c0_i32, %c0_i32_0 : i32, i32
  }
  func.func @transform_3(%arg0: i32) -> (i32, i32) {
    %c0_i32 = arith.constant 0 : i32
    %c0_i32_0 = arith.constant 0 : i32
    %c0_i32_1 = arith.constant 0 : i32
    return %c0_i32, %c0_i32_0 : i32, i32
  }
  func.func @transform_4(%arg0: i32) -> (i32, i32) {
    %c0_i32 = arith.constant 0 : i32
    %c0_i32_0 = arith.constant 0 : i32
    return %arg0, %c0_i32 : i32, i32
  }
  func.func @transform_5(%arg0: i32) -> (i32, i32) {
    %c0_i32 = arith.constant 0 : i32
    %c0_i32_0 = arith.constant 0 : i32
    return %arg0, %c0_i32 : i32, i32
  }
}

</mosaic_0001>

<llo_original>
// kernel: tile.16
$region0: #{tile.16}
  #allocation0 [shape = 's32[1]{0}', space=sflag, size = 0x4, scoped, tag = 'scoped memory for tile.16']
  %s0 = inlined_call_operand.vmem [shape: f32[2], index: 0, kind: input, shape index: {}]
  %s1 = inlined_call_operand.vmem [shape: f32[64,2], index: 1, kind: output, shape index: {}]
  // Predicated region
  $region2: #{tile.16} parent=0 // pred_check
    _
  $region3: #{tile.16} parent=0 // pred_check_branch
    %3 = sbr.rel (0) target = $region5
  $region4: #{tile.16} parent=0 // pred_region
    _
  $region5: #{tile.16} parent=0 // pred_fallthru
    _
  %v4 = vld [vmem:[%s0] ss:$0 sm:$0xff]
  %5 = vst [vmem:[%s1] sm:$0xff] %v4
  %s6 = scalar_lea.vmem %s1, 8
  %7 = vst [vmem:[%s6] sm:$0xff] %v4
  %s8 = scalar_lea.vmem %s1, 16
  %9 = vst [vmem:[%s8] sm:$0xff] %v4
  %s10 = scalar_lea.vmem %s1, 24
  %11 = vst [vmem:[%s10] sm:$0xff] %v4
  %s12 = scalar_lea.vmem %s1, 32
  %13 = vst [vmem:[%s12] sm:$0xff] %v4
  %s14 = scalar_lea.vmem %s1, 40
  %15 = vst [vmem:[%s14] sm:$0xff] %v4
  %s16 = scalar_lea.vmem %s1, 48
  %17 = vst [vmem:[%s16] sm:$0xff] %v4
  %s18 = scalar_lea.vmem %s1, 56
  %19 = vst [vmem:[%s18] sm:$0xff] %v4

// kernel: tile.17
$region0: #{tile.17}
  %s0 = inlined_call_operand.vmem [shape: f32[64,2], index: 0, kind: input, shape index: {}]
  %s1 = inlined_call_operand.vmem [shape: f32[1,128], index: 1, kind: output, shape index: {}]
  $region1: #{tile.17} parent=0
    #allocation0 [shape = 'u8[4096]{0}', space=vmem, size = 0x1000, scoped, tag = 'scoped mem for output reshape']
    %v2 = vld [vmem:[%s0] sm:$0x1]
    %vm3 = vcmask 15360
    %4 = vst.msk [vmem:[#allocation0] sm:$0x1] %vm3, %v2
    %s5 = scalar_lea.vmem %s0, 63
    %v6 = vld [vmem:[%s5] sm:$0x1]
    %7 = vrot.lane.b32.xlu0 %v6, 126
    %v8 = vpop.permute.xlu0 %7
    %vm9 = vcmask 1048560
    %10 = vst.msk [vmem:[#allocation0] sm:$0x1] %vm9, %v8
    %s11 = scalar_lea.vmem %s0, 62
    %v12 = vld [vmem:[%s11] sm:$0x1]
    %13 = vrot.lane.b32.xlu0 %v12, 124
    %v14 = vpop.permute.xlu0 %13
    %vm15 = vcmask 1032160
    %16 = vst.msk [vmem:[#allocation0] sm:$0x1] %vm15, %v14
    %s17 = scalar_lea.vmem %s0, 61
    %v18 = vld [vmem:[%s17] sm:$0x1]
    %19 = vrot.lane.b32.xlu0 %v18, 122
    %v20 = vpop.permute.xlu0 %19
    %vm21 = vcmask 1015760
    %22 = vst.msk [vmem:[#allocation0] sm:$0x1] %vm21, %v20
    %s23 = scalar_lea.vmem %s0, 60
    %v24 = vld [vmem:[%s23] sm:$0x1]
    %25 = vrot.lane.b32.xlu0 %v24, 120
    %v26 = vpop.permute.xlu0 %25
    %vm27 = vcmask 999360
    %28 = vst.msk [vmem:[#allocation0] sm:$0x1] %vm27, %v26
    %s29 = scalar_lea.vmem %s0, 59
    %v30 = vld [vmem:[%s29] sm:$0x1]
    %31 = vrot.lane.b32.xlu0 %v30, 118
    %v32 = vpop.permute.xlu0 %31
    %vm33 = vcmask 982960
    %34 = vst.msk [vmem:[#allocation0] sm:$0x1] %vm33, %v32
    %s35 = scalar_lea.vmem %s0, 58
    %v36 = vld [vmem:[%s35] sm:$0x1]
    %37 = vrot.lane.b32.xlu0 %v36, 116
    %v38 = vpop.permute.xlu0 %37
    %vm39 = vcmask 966560
    %40 = vst.msk [vmem:[#allocation0] sm:$0x1] %vm39, %v38
    %s41 = scalar_lea.vmem %s0, 57
    %v42 = vld [vmem:[%s41] sm:$0x1]
    %43 = vrot.lane.b32.xlu0 %v42, 114
    %v44 = vpop.permute.xlu0 %43
    %vm45 = vcmask 950160
    %46 = vst.msk [vmem:[#allocation0] sm:$0x1] %vm45, %v44
    %s47 = scalar_lea.vmem %s0, 56
    %v48 = vld [vmem:[%s47] sm:$0x1]
    %49 = vrot.lane.b32.xlu0 %v48, 112
    %v50 = vpop.permute.xlu0 %49
    %vm51 = vcmask 933760
    %52 = vst.msk [vmem:[#allocation0] sm:$0x1] %vm51, %v50
    %s53 = scalar_lea.vmem %s0, 55
    %v54 = vld [vmem:[%s53] sm:$0x1]
    %55 = vrot.lane.b32.xlu0 %v54, 110
    %v56 = vpop.permute.xlu0 %55
    %vm57 = vcmask 917360
    %58 = vst.msk [vmem:[#allocation0] sm:$0x1] %vm57, %v56
    %s59 = scalar_lea.vmem %s0, 54
    %v60 = vld [vmem:[%s59] sm:$0x1]
    %61 = vrot.lane.b32.xlu0 %v60, 108
    %v62 = vpop.permute.xlu0 %61
    %vm63 = vcmask 900960
    %64 = vst.msk [vmem:[#allocation0] sm:$0x1] %vm63, %v62
    %s65 = scalar_lea.vmem %s0, 53
    %v66 = vld [vmem:[%s65] sm:$0x1]
    %67 = vrot.lane.b32.xlu0 %v66, 106
    %v68 = vpop.permute.xlu0 %67
    %vm69 = vcmask 884560
    %70 = vst.msk [vmem:[#allocation0] sm:$0x1] %vm69, %v68
    %s71 = scalar_lea.vmem %s0, 52
    %v72 = vld [vmem:[%s71] sm:$0x1]
    %73 = vrot.lane.b32.xlu0 %v72, 104
    %v74 = vpop.permute.xlu0 %73
    %vm75 = vcmask 868160
    %76 = vst.msk [vmem:[#allocation0] sm:$0x1] %vm75, %v74
    %s77 = scalar_lea.vmem %s0, 51
    %v78 = vld [vmem:[%s77] sm:$0x1]
    %79 = vrot.lane.b32.xlu0 %v78, 102
    %v80 = vpop.permute.xlu0 %79
    %vm81 = vcmask 851760
    %82 = vst.msk [vmem:[#allocation0] sm:$0x1] %vm81, %v80
    %s83 = scalar_lea.vmem %s0, 50
    %v84 = vld [vmem:[%s83] sm:$0x1]
    %85 = vrot.lane.b32.xlu0 %v84, 100
    %v86 = vpop.permute.xlu0 %85
    %vm87 = vcmask 835360
    %88 = vst.msk [vmem:[#allocation0] sm:$0x1] %vm87, %v86
    %s89 = scalar_lea.vmem %s0, 49
    %v90 = vld [vmem:[%s89] sm:$0x1]
    %91 = vrot.lane.b32.xlu0 %v90, 98
    %v92 = vpop.permute.xlu0 %91
    %vm93 = vcmask 818960
    %94 = vst.msk [vmem:[#allocation0] sm:$0x1] %vm93, %v92
    %s95 = scalar_lea.vmem %s0, 48
    %v96 = vld [vmem:[%s95] sm:$0x1]
    %97 = vrot.lane.b32.xlu0 %v96, 96
    %v98 = vpop.permute.xlu0 %97
    %vm99 = vcmask 802560
    %100 = vst.msk [vmem:[#allocation0] sm:$0x1] %vm99, %v98
    %s101 = scalar_lea.vmem %s0, 47
    %v102 = vld [vmem:[%s101] sm:$0x1]
    %103 = vrot.lane.b32.xlu0 %v102, 94
    %v104 = vpop.permute.xlu0 %103
    %vm105 = vcmask 786160
    %106 = vst.msk [vmem:[#allocation0] sm:$0x1] %vm105, %v104
    %s107 = scalar_lea.vmem %s0, 46
    %v108 = vld [vmem:[%s107] sm:$0x1]
    %109 = vrot.lane.b32.xlu0 %v108, 92
    %v110 = vpop.permute.xlu0 %109
    %vm111 = vcmask 769760
    %112 = vst.msk [vmem:[#allocation0] sm:$0x1] %vm111, %v110
    %s113 = scalar_lea.vmem %s0, 45
    %v114 = vld [vmem:[%s113] sm:$0x1]
    %115 = vrot.lane.b32.xlu0 %v114, 90
    %v116 = vpop.permute.xlu0 %115
    %vm117 = vcmask 753360
    %118 = vst.msk [vmem:[#allocation0] sm:$0x1] %vm117, %v116
    %s119 = scalar_lea.vmem %s0, 44
    %v120 = vld [vmem:[%s119] sm:$0x1]
    %121 = vrot.lane.b32.xlu0 %v120, 88
    %v122 = vpop.permute.xlu0 %121
    %vm123 = vcmask 736960
    %124 = vst.msk [vmem:[#allocation0] sm:$0x1] %vm123, %v122
    %s125 = scalar_lea.vmem %s0, 43
    %v126 = vld [vmem:[%s125] sm:$0x1]
    %127 = vrot.lane.b32.xlu0 %v126, 86
    %v128 = vpop.permute.xlu0 %127
    %vm129 = vcmask 720560
    %130 = vst.msk [vmem:[#allocation0] sm:$0x1] %vm129, %v128
    %s131 = scalar_lea.vmem %s0, 42
    %v132 = vld [vmem:[%s131] sm:$0x1]
    %133 = vrot.lane.b32.xlu0 %v132, 84
    %v134 = vpop.permute.xlu0 %133
    %vm135 = vcmask 704160
    %136 = vst.msk [vmem:[#allocation0] sm:$0x1] %vm135, %v134
    %s137 = scalar_lea.vmem %s0, 41
    %v138 = vld [vmem:[%s137] sm:$0x1]
    %139 = vrot.lane.b32.xlu0 %v138, 82
    %v140 = vpop.permute.xlu0 %139
    %vm141 = vcmask 687760
    %142 = vst.msk [vmem:[#allocation0] sm:$0x1] %vm141, %v140
    %s143 = scalar_lea.vmem %s0, 40
    %v144 = vld [vmem:[%s143] sm:$0x1]
    %145 = vrot.lane.b32.xlu0 %v144, 80
    %v146 = vpop.permute.xlu0 %145
    %vm147 = vcmask 671360
    %148 = vst.msk [vmem:[#allocation0] sm:$0x1] %vm147, %v146
    %s149 = scalar_lea.vmem %s0, 39
    %v150 = vld [vmem:[%s149] sm:$0x1]
    %151 = vrot.lane.b32.xlu0 %v150, 78
    %v152 = vpop.permute.xlu0 %151
    %vm153 = vcmask 654960
    %154 = vst.msk [vmem:[#allocation0] sm:$0x1] %vm153, %v152
    %s155 = scalar_lea.vmem %s0, 38
    %v156 = vld [vmem:[%s155] sm:$0x1]
    %157 = vrot.lane.b32.xlu0 %v156, 76
    %v158 = vpop.permute.xlu0 %157
    %vm159 = vcmask 638560
    %160 = vst.msk [vmem:[#allocation0] sm:$0x1] %vm159, %v158
    %s161 = scalar_lea.vmem %s0, 37
    %v162 = vld [vmem:[%s161] sm:$0x1]
    %163 = vrot.lane.b32.xlu0 %v162, 74
    %v164 = vpop.permute.xlu0 %163
    %vm165 = vcmask 622160
    %166 = vst.msk [vmem:[#allocation0] sm:$0x1] %vm165, %v164
    %s167 = scalar_lea.vmem %s0, 36
    %v168 = vld [vmem:[%s167] sm:$0x1]
    %169 = vrot.lane.b32.xlu0 %v168, 72
    %v170 = vpop.permute.xlu0 %169
    %vm171 = vcmask 605760
    %172 = vst.msk [vmem:[#allocation0] sm:$0x1] %vm171, %v170
    %s173 = scalar_lea.vmem %s0, 35
    %v174 = vld [vmem:[%s173] sm:$0x1]
    %175 = vrot.lane.b32.xlu0 %v174, 70
    %v176 = vpop.permute.xlu0 %175
    %vm177 = vcmask 589360
    %178 = vst.msk [vmem:[#allocation0] sm:$0x1] %vm177, %v176
    %s179 = scalar_lea.vmem %s0, 34
    %v180 = vld [vmem:[%s179] sm:$0x1]
    %181 = vrot.lane.b32.xlu0 %v180, 68
    %v182 = vpop.permute.xlu0 %181
    %vm183 = vcmask 572960
    %184 = vst.msk [vmem:[#allocation0] sm:$0x1] %vm183, %v182
    %s185 = scalar_lea.vmem %s0, 33
    %v186 = vld [vmem:[%s185] sm:$0x1]
    %187 = vrot.lane.b32.xlu0 %v186, 66
    %v188 = vpop.permute.xlu0 %187
    %vm189 = vcmask 556560
    %190 = vst.msk [vmem:[#allocation0] sm:$0x1] %vm189, %v188
    %s191 = scalar_lea.vmem %s0, 32
    %v192 = vld [vmem:[%s191] sm:$0x1]
    %193 = vrot.lane.b32.xlu0 %v192, 64
    %v194 = vpop.permute.xlu0 %193
    %vm195 = vcmask 540160
    %196 = vst.msk [vmem:[#allocation0] sm:$0x1] %vm195, %v194
    %s197 = scalar_lea.vmem %s0, 31
    %v198 = vld [vmem:[%s197] sm:$0x1]
    %199 = vrot.lane.b32.xlu0 %v198, 62
    %v200 = vpop.permute.xlu0 %199
    %vm201 = vcmask 523760
    %202 = vst.msk [vmem:[#allocation0] sm:$0x1] %vm201, %v200
    %s203 = scalar_lea.vmem %s0, 30
    %v204 = vld [vmem:[%s203] sm:$0x1]
    %205 = vrot.lane.b32.xlu0 %v204, 60
    %v206 = vpop.permute.xlu0 %205
    %vm207 = vcmask 507360
    %208 = vst.msk [vmem:[#allocation0] sm:$0x1] %vm207, %v206
    %s209 = scalar_lea.vmem %s0, 29
    %v210 = vld [vmem:[%s209] sm:$0x1]
    %211 = vrot.lane.b32.xlu0 %v210, 58
    %v212 = vpop.permute.xlu0 %211
    %vm213 = vcmask 490960
    %214 = vst.msk [vmem:[#allocation0] sm:$0x1] %vm213, %v212
    %s215 = scalar_lea.vmem %s0, 28
    %v216 = vld [vmem:[%s215] sm:$0x1]
    %217 = vrot.lane.b32.xlu0 %v216, 56
    %v218 = vpop.permute.xlu0 %217
    %vm219 = vcmask 474560
    %220 = vst.msk [vmem:[#allocation0] sm:$0x1] %vm219, %v218
    %s221 = scalar_lea.vmem %s0, 27
    %v222 = vld [vmem:[%s221] sm:$0x1]
    %223 = vrot.lane.b32.xlu0 %v222, 54
    %v224 = vpop.permute.xlu0 %223
    %vm225 = vcmask 458160
    %226 = vst.msk [vmem:[#allocation0] sm:$0x1] %vm225, %v224
    %s227 = scalar_lea.vmem %s0, 26
    %v228 = vld [vmem:[%s227] sm:$0x1]
    %229 = vrot.lane.b32.xlu0 %v228, 52
    %v230 = vpop.permute.xlu0 %229
    %vm231 = vcmask 441760
    %232 = vst.msk [vmem:[#allocation0] sm:$0x1] %vm231, %v230
    %s233 = scalar_lea.vmem %s0, 25
    %v234 = vld [vmem:[%s233] sm:$0x1]
    %235 = vrot.lane.b32.xlu0 %v234, 50
    %v236 = vpop.permute.xlu0 %235
    %vm237 = vcmask 425360
    %238 = vst.msk [vmem:[#allocation0] sm:$0x1] %vm237, %v236
    %s239 = scalar_lea.vmem %s0, 24
    %v240 = vld [vmem:[%s239] sm:$0x1]
    %241 = vrot.lane.b32.xlu0 %v240, 48
    %v242 = vpop.permute.xlu0 %241
    %vm243 = vcmask 408960
    %244 = vst.msk [vmem:[#allocation0] sm:$0x1] %vm243, %v242
    %s245 = scalar_lea.vmem %s0, 23
    %v246 = vld [vmem:[%s245] sm:$0x1]
    %247 = vrot.lane.b32.xlu0 %v246, 46
    %v248 = vpop.permute.xlu0 %247
    %vm249 = vcmask 392560
    %250 = vst.msk [vmem:[#allocation0] sm:$0x1] %vm249, %v248
    %s251 = scalar_lea.vmem %s0, 22
    %v252 = vld [vmem:[%s251] sm:$0x1]
    %253 = vrot.lane.b32.xlu0 %v252, 44
    %v254 = vpop.permute.xlu0 %253
    %vm255 = vcmask 376160
    %256 = vst.msk [vmem:[#allocation0] sm:$0x1] %vm255, %v254
    %s257 = scalar_lea.vmem %s0, 21
    %v258 = vld [vmem:[%s257] sm:$0x1]
    %259 = vrot.lane.b32.xlu0 %v258, 42
    %v260 = vpop.permute.xlu0 %259
    %vm261 = vcmask 359760
    %262 = vst.msk [vmem:[#allocation0] sm:$0x1] %vm261, %v260
    %s263 = scalar_lea.vmem %s0, 20
    %v264 = vld [vmem:[%s263] sm:$0x1]
    %265 = vrot.lane.b32.xlu0 %v264, 40
    %v266 = vpop.permute.xlu0 %265
    %vm267 = vcmask 343360
    %268 = vst.msk [vmem:[#allocation0] sm:$0x1] %vm267, %v266
    %s269 = scalar_lea.vmem %s0, 19
    %v270 = vld [vmem:[%s269] sm:$0x1]
    %271 = vrot.lane.b32.xlu0 %v270, 38
    %v272 = vpop.permute.xlu0 %271
    %vm273 = vcmask 326960
    %274 = vst.msk [vmem:[#allocation0] sm:$0x1] %vm273, %v272
    %s275 = scalar_lea.vmem %s0, 18
    %v276 = vld [vmem:[%s275] sm:$0x1]
    %277 = vrot.lane.b32.xlu0 %v276, 36
    %v278 = vpop.permute.xlu0 %277
    %vm279 = vcmask 310560
    %280 = vst.msk [vmem:[#allocation0] sm:$0x1] %vm279, %v278
    %s281 = scalar_lea.vmem %s0, 17
    %v282 = vld [vmem:[%s281] sm:$0x1]
    %283 = vrot.lane.b32.xlu0 %v282, 34
    %v284 = vpop.permute.xlu0 %283
    %vm285 = vcmask 294160
    %286 = vst.msk [vmem:[#allocation0] sm:$0x1] %vm285, %v284
    %s287 = scalar_lea.vmem %s0, 16
    %v288 = vld [vmem:[%s287] sm:$0x1]
    %289 = vrot.lane.b32.xlu0 %v288, 32
    %v290 = vpop.permute.xlu0 %289
    %vm291 = vcmask 277760
    %292 = vst.msk [vmem:[#allocation0] sm:$0x1] %vm291, %v290
    %s293 = scalar_lea.vmem %s0, 15
    %v294 = vld [vmem:[%s293] sm:$0x1]
    %295 = vrot.lane.b32.xlu0 %v294, 30
    %v296 = vpop.permute.xlu0 %295
    %vm297 = vcmask 261360
    %298 = vst.msk [vmem:[#allocation0] sm:$0x1] %vm297, %v296
    %s299 = scalar_lea.vmem %s0, 14
    %v300 = vld [vmem:[%s299] sm:$0x1]
    %301 = vrot.lane.b32.xlu0 %v300, 28
    %v302 = vpop.permute.xlu0 %301
    %vm303 = vcmask 244960
    %304 = vst.msk [vmem:[#allocation0] sm:$0x1] %vm303, %v302
    %s305 = scalar_lea.vmem %s0, 13
    %v306 = vld [vmem:[%s305] sm:$0x1]
    %307 = vrot.lane.b32.xlu0 %v306, 26
    %v308 = vpop.permute.xlu0 %307
    %vm309 = vcmask 228560
    %310 = vst.msk [vmem:[#allocation0] sm:$0x1] %vm309, %v308
    %s311 = scalar_lea.vmem %s0, 12
    %v312 = vld [vmem:[%s311] sm:$0x1]
    %313 = vrot.lane.b32.xlu0 %v312, 24
    %v314 = vpop.permute.xlu0 %313
    %vm315 = vcmask 212160
    %316 = vst.msk [vmem:[#allocation0] sm:$0x1] %vm315, %v314
    %s317 = scalar_lea.vmem %s0, 11
    %v318 = vld [vmem:[%s317] sm:$0x1]
    %319 = vrot.lane.b32.xlu0 %v318, 22
    %v320 = vpop.permute.xlu0 %319
    %vm321 = vcmask 195760
    %322 = vst.msk [vmem:[#allocation0] sm:$0x1] %vm321, %v320
    %s323 = scalar_lea.vmem %s0, 10
    %v324 = vld [vmem:[%s323] sm:$0x1]
    %325 = vrot.lane.b32.xlu0 %v324, 20
    %v326 = vpop.permute.xlu0 %325
    %vm327 = vcmask 179360
    %328 = vst.msk [vmem:[#allocation0] sm:$0x1] %vm327, %v326
    %s329 = scalar_lea.vmem %s0, 9
    %v330 = vld [vmem:[%s329] sm:$0x1]
    %331 = vrot.lane.b32.xlu0 %v330, 18
    %v332 = vpop.permute.xlu0 %331
    %vm333 = vcmask 162960
    %334 = vst.msk [vmem:[#allocation0] sm:$0x1] %vm333, %v332
    %s335 = scalar_lea.vmem %s0, 8
    %v336 = vld [vmem:[%s335] sm:$0x1]
    %337 = vrot.lane.b32.xlu0 %v336, 16
    %v338 = vpop.permute.xlu0 %337
    %vm339 = vcmask 146560
    %340 = vst.msk [vmem:[#allocation0] sm:$0x1] %vm339, %v338
    %s341 = scalar_lea.vmem %s0, 7
    %v342 = vld [vmem:[%s341] sm:$0x1]
    %343 = vrot.lane.b32.xlu0 %v342, 14
    %v344 = vpop.permute.xlu0 %343
    %vm345 = vcmask 130160
    %346 = vst.msk [vmem:[#allocation0] sm:$0x1] %vm345, %v344
    %s347 = scalar_lea.vmem %s0, 6
    %v348 = vld [vmem:[%s347] sm:$0x1]
    %349 = vrot.lane.b32.xlu0 %v348, 12
    %v350 = vpop.permute.xlu0 %349
    %vm351 = vcmask 113760
    %352 = vst.msk [vmem:[#allocation0] sm:$0x1] %vm351, %v350
    %s353 = scalar_lea.vmem %s0, 5
    %v354 = vld [vmem:[%s353] sm:$0x1]
    %355 = vrot.lane.b32.xlu0 %v354, 10
    %v356 = vpop.permute.xlu0 %355
    %vm357 = vcmask 97360
    %358 = vst.msk [vmem:[#allocation0] sm:$0x1] %vm357, %v356
    %s359 = scalar_lea.vmem %s0, 4
    %v360 = vld [vmem:[%s359] sm:$0x1]
    %361 = vrot.lane.b32.xlu0 %v360, 8
    %v362 = vpop.permute.xlu0 %361
    %vm363 = vcmask 80960
    %364 = vst.msk [vmem:[#allocation0] sm:$0x1] %vm363, %v362
    %s365 = scalar_lea.vmem %s0, 3
    %v366 = vld [vmem:[%s365] sm:$0x1]
    %367 = vrot.lane.b32.xlu0 %v366, 6
    %v368 = vpop.permute.xlu0 %367
    %vm369 = vcmask 64560
    %370 = vst.msk [vmem:[#allocation0] sm:$0x1] %vm369, %v368
    %s371 = scalar_lea.vmem %s0, 2
    %v372 = vld [vmem:[%s371] sm:$0x1]
    %373 = vrot.lane.b32.xlu0 %v372, 4
    %v374 = vpop.permute.xlu0 %373
    %vm375 = vcmask 48160
    %376 = vst.msk [vmem:[#allocation0] sm:$0x1] %vm375, %v374
    %s377 = scalar_lea.vmem %s0, 1
    %v378 = vld [vmem:[%s377] sm:$0x1]
    %379 = vrot.lane.b32.xlu0 %v378, 2
    %v380 = vpop.permute.xlu0 %379
    %vm381 = vcmask 31760
    %382 = vst.msk [vmem:[#allocation0] sm:$0x1] %vm381, %v380
    %s384 = sshllo.u32 0, 1
    %v386 = vld [vmem:[#allocation0] sm:%s384]
    %s387 = sshllo.u32 0, 1
    %388 = vst [vmem:[%s1] sm:%s387] %v386

// kernel: planar_flow.1
$region0: #{planar_flow.1}
  #allocation0 [shape = 'u32[]', space=smem, size = 0x4, offset = 0x4, fixed_abs, tag = 'smem constant byte address 0x4 - core index']
  #allocation1 [shape = 'u32[144,128]{1,0:T(1,128)}', space=vmem, size = 0x12000, scoped, tag = 'internal scratch']
  %s0 = inlined_call_operand.vmem [shape: f32[2], index: 0, kind: input, shape index: {}]
  %s1 = inlined_call_operand.vmem [shape: f32[1,128], index: 1, kind: input, shape index: {}, may-alias: {1,4}]
  %s2 = inlined_call_operand.vmem [shape: f32[1,128], index: 2, kind: input, shape index: {}]
  %s3 = inlined_call_operand.vmem [shape: f32[1,128], index: 3, kind: input, shape index: {}]
  %s4 = inlined_call_operand.vmem [shape: f32[1,128], index: 4, kind: output, shape index: {0}, may-alias: {1,4}]
  %s5 = inlined_call_operand.vmem [shape: f32[1,128], index: 5, kind: output, shape index: {1}]
  %6 = xla_tuple %s4, %s5
  %s7 = sld [smem:[#allocation0]]
  $region38: #{planar_flow.1} parent=0
    _
  %s9 = ssub.s32 1, %s7
  %s10 = scalar_select 0, %s9, %s7
  $region1: #{planar_flow.1} parent=0
    #allocation2 [shape = 'u8[512]{0}', space=smem, size = 0x200, scoped, tag = 'input window, operand 0, single buffered']
    #allocation3 [shape = 's32[1]{0}', space=sflag, size = 0x4, scoped, tag = 'scoped memory for planar_flow.1']
    %11 = vsyncpa [#allocation3], 0
    // Predicated region
    $region2: #{planar_flow.1} parent=1 // pred_check
      _
    $region3: #{planar_flow.1} parent=1 // pred_check_branch
      %13 = sbr.rel (0) target = $region5
    $region4: #{planar_flow.1} parent=1 // pred_region
      %s15 = ssub.s32 16, 16
      %16 = vsyncadd [#allocation3], %s15
      %s18 = sshll.u32 %s0, 4
      %s19 = int_to_ptr.vmem [resolvable:$true] %s18
      %21 = dma.vmem_to_smem %s19, 16, [#allocation2], [#allocation3]
    $region5: #{planar_flow.1} parent=1 // pred_fallthru
      _
    // Predicated region
    $region6: #{planar_flow.1} parent=1 // pred_check
      _
    $region7: #{planar_flow.1} parent=1 // pred_check_branch
      %23 = sbr.rel (0) target = $region9
    $region8: #{planar_flow.1} parent=1 // pred_region
      _
    $region9: #{planar_flow.1} parent=1 // pred_fallthru
      _
    // Predicated region
    $region10: #{planar_flow.1} parent=1 // pred_check
      _
    $region11: #{planar_flow.1} parent=1 // pred_check_branch
      %25 = sbr.rel (0) target = $region13
    $region12: #{planar_flow.1} parent=1 // pred_region
      _
    $region13: #{planar_flow.1} parent=1 // pred_fallthru
      _
    // Predicated region
    $region14: #{planar_flow.1} parent=1 // pred_check
      _
    $region15: #{planar_flow.1} parent=1 // pred_check_branch
      %27 = sbr.rel (0) target = $region17
    $region16: #{planar_flow.1} parent=1 // pred_region
      _
    $region17: #{planar_flow.1} parent=1 // pred_fallthru
      _
    // Predicated region
    $region18: #{planar_flow.1} parent=1 // pred_check
      _
    $region19: #{planar_flow.1} parent=1 // pred_check_branch
      %29 = sbr.rel (0) target = $region21
    $region20: #{planar_flow.1} parent=1 // pred_region
      %30 = dma.done [#allocation3], 16
    $region21: #{planar_flow.1} parent=1 // pred_fallthru
      _
    %31 = sfence
    %s32 = sld [smem:[#allocation2]]
    %s33 = sld [smem:[#allocation2 + $0x1]]
    %v34 = vld [vmem:[%s1] sm:$0x1]
    %v35 = vld [vmem:[%s2] sm:$0x1]
    %v36 = vld [vmem:[%s3] sm:$0x1]
    %v37 = vmul.f32 %v34, %v35
    %v38 = vlaneseq
    %v39 = vand.u32 %v38, 127
    %40 = vrot.lane.b32.xlu0 %v37, 127
    %v41 = vpop.permute.xlu0 %40
    %42 = vrot.lane.b32.xlu0 %v37, 1
    %v43 = vpop.permute.xlu0 %42
    %44 = vrot.lane.b32.xlu0 %v39, 127
    %v45 = vpop.permute.xlu0 %44
    %v46 = vxor.u32 %v39, 1
    %vm47 = vcmp.eq.s32.totalorder %v45, %v46
    %v48 = vsel %vm47, 1, 0
    %v49 = vcvt.s32.f32 %v48
    %v50 = vmul.f32 %v49, %v41
    %v51 = vsub.f32 1.0, %v49
    %v52 = vmul.f32 %v51, %v43
    %v53 = vadd.f32 %v50, %v52
    %v54 = vadd.f32 %v37, %v53
    %v55 = vstv %s32
    %v56 = vadd.f32 %v54, %v55
    %v57 = vtanh.pop %v56
    %v58 = vsub.f32 1.0, %v57
    %v59 = vadd.f32 %v57, 1.0
    %v60 = vmul.f32 %v58, %v59
    %v61 = vstv %s33
    %v62 = vmul.f32 %v61, %v60
    %v63 = vadd.f32 %v62, 1.0
    %v64 = vand.u32 2147483647, %v63
    %v65 = vlog2.pop %v64
    %v66 = vmul.f32 %v65, 0.6931472
    %67 = vst [vmem:[%s5] sm:$0x1] %v66
    %v68 = vmul.f32 %v36, %v57
    %v69 = vadd.f32 %v34, %v68
    %70 = vst [vmem:[%s4] sm:$0x1] %v69
    // Predicated region
    $region22: #{planar_flow.1} parent=1 // pred_check
      _
    $region23: #{planar_flow.1} parent=1 // pred_check_branch
      %72 = sbr.rel (0) target = $region25
    $region24: #{planar_flow.1} parent=1 // pred_region
      _
    $region25: #{planar_flow.1} parent=1 // pred_fallthru
      _
    // Predicated region
    $region26: #{planar_flow.1} parent=1 // pred_check
      _
    $region27: #{planar_flow.1} parent=1 // pred_check_branch
      %74 = sbr.rel (0) target = $region29
    $region28: #{planar_flow.1} parent=1 // pred_region
      _
    $region29: #{planar_flow.1} parent=1 // pred_fallthru
      _
    // Predicated region
    $region30: #{planar_flow.1} parent=1 // pred_check
      _
    $region31: #{planar_flow.1} parent=1 // pred_check_branch
      %76 = sbr.rel (0) target = $region33
    $region32: #{planar_flow.1} parent=1 // pred_region
      _
    $region33: #{planar_flow.1} parent=1 // pred_fallthru
      _
    // Predicated region
    $region34: #{planar_flow.1} parent=1 // pred_check
      _
    $region35: #{planar_flow.1} parent=1 // pred_check_branch
      %78 = sbr.rel (0) target = $region37
    $region36: #{planar_flow.1} parent=1 // pred_region
      _
    $region37: #{planar_flow.1} parent=1 // pred_fallthru
      _
    %79 = vsyncpa [#allocation3], 1

</llo_original>
